<compile_context>
chip_gen: v7x
topology: tpu7x:2x2x1
jax: 0.10.0
libtpu: 0.0.40
codegen_flags: <defaults>
</compile_context>

<pallas_src>
import jax
import jax.numpy as jnp
from jax.experimental import pallas as pl
from jax.experimental.pallas import tpu as pltpu


def _segment_localizer_kernel(text_t_ref, video_ref, packed_ref, out_ref):
    """One T-tile of the fused SegmentLocalizer forward.

    text_t_ref : (d_s, N)             resident: text^T
    video_ref  : (TM, d_v)            current tile of video (natural layout)
    packed_ref : (d_v + d_s + 2, H)   resident: rows [wc_v ; wc_t ; bc ; w3^T]
    out_ref    : (TM, 1)              scores column for this tile
    """
    d_s = text_t_ref.shape[0]
    d_v = video_ref.shape[1]

    wc_v = packed_ref[pl.ds(0, d_v), :]                # (d_v, H)
    wc_t = packed_ref[pl.ds(d_v, d_s), :]              # (d_s, H)
    bc_row = packed_ref[pl.ds(d_v + d_s, 1), :]        # (1, H)
    w3_row = packed_ref[pl.ds(d_v + d_s + 1, 1), :]    # (1, H)

    # weight_pipeline: softmax over the size-1 last dim is identically 1.0,
    # so the attention weights are all ones and h_o = sum_n text[n].
    h_o_col = jnp.sum(text_t_ref[...], axis=1, keepdims=True)            # (d_s, 1)

    # Effective bias of cross Linear-1 with concat(video, h_o) folded in:
    #   bias[h] = sum_k h_o[k] * wc_t[k, h] + bc[h]
    # VPU multiply + sublane reduce (tiny; keeps width-1 work off the MXU).
    bias_row = jnp.sum(wc_t * h_o_col, axis=0, keepdims=True) + bc_row   # (1, H)

    # Main matmul on the MXU: (TM, d_v) @ (d_v, H) -> (TM, H), f32 accumulate.
    pre = jnp.dot(video_ref[...], wc_v, preferred_element_type=jnp.float32)
    h2 = jnp.tanh(pre + bias_row)                                        # (TM, H)

    # Final Linear(H, 1, bias=False): VPU multiply + lane (XLU) reduce.
    out_ref[...] = jnp.sum(h2 * w3_row, axis=1,
                           keepdims=True).astype(out_ref.dtype)          # (TM, 1)


def segment_localizer(text, video, params, *, max_tile=512):
    """text: (N, d_s), video: (T, d_v) -> scores (T, 1) (eval-mode forward)."""
    assert max_tile % 128 == 0
    # w1, b1, w2 (weight_pipeline) provably do not affect the output (softmax
    # over a size-1 dim == 1); intentionally unused in the kernel.
    _w1, _b1, _w2, wc_v, wc_t, bc, w3 = params
    N, d_s = text.shape
    T, d_v = video.shape
    H = wc_v.shape[1]

    # Pack all cross-pipeline params into one (d_v + d_s + 2, H) buffer:
    #   rows = [ wc_v (d_v) ; wc_t (d_s) ; bc (1) ; w3^T (1) ]
    packed = jnp.concatenate([wc_v, wc_t, bc, w3.T], axis=0).astype(jnp.float32)

    text_t = text.T.astype(jnp.float32)               # (d_s, N), tiny
    video_f = video.astype(jnp.float32)               # (T, d_v), natural layout

    # Balanced T tiling: one full-array tile for small T; otherwise the
    # smallest multiple-of-128 tile covering T in ceil(T/max_tile) equal
    # tiles.  Tile rows live on the sublane axis; double-buffered video
    # tiles + resident weights + the (TM, H) intermediate stay well under
    # the default scoped-VMEM limit even on v7x (64 MiB physical).
    if T <= max_tile:
        tm, t_pad, n_tiles = T, T, 1
    else:
        t_128 = ((T + 127) // 128) * 128
        n_tiles = -(-t_128 // max_tile)
        tm = ((-(-t_128 // n_tiles) + 127) // 128) * 128
        t_pad = n_tiles * tm
        video_f = jnp.pad(video_f, ((0, t_pad - T), (0, 0)))

    n_rows = d_v + d_s + 2
    cost = pl.CostEstimate(
        flops=int(2 * t_pad * d_v * H + 3 * t_pad * H
                  + n_tiles * (2 * d_s * H + N * d_s)),
        transcendentals=int(t_pad * H),
        bytes_accessed=int(4 * (N * d_s + t_pad * d_v + n_rows * H + t_pad)),
    )

    out = pl.pallas_call(
        _segment_localizer_kernel,
        out_shape=jax.ShapeDtypeStruct((t_pad, 1), jnp.float32),
        grid=(n_tiles,),
        in_specs=[
            pl.BlockSpec((d_s, N), lambda i: (0, 0)),       # text^T   (resident)
            pl.BlockSpec((tm, d_v), lambda i: (i, 0)),      # video tile
            pl.BlockSpec((n_rows, H), lambda i: (0, 0)),    # packed weights (resident)
        ],
        out_specs=pl.BlockSpec((tm, 1), lambda i: (i, 0)),
        compiler_params=pltpu.CompilerParams(
            dimension_semantics=("parallel",)),
        cost_estimate=cost,
    )(text_t, video_f, packed)

    return out[:T]                                     # (T, 1), like the module


def _reference(text, video, params):
    """Pure-JAX reference of the PyTorch forward (eval mode), including the
    (output-irrelevant) weight_pipeline."""
    w1, b1, w2, wc_v, wc_t, bc, w3 = params
    s = jnp.tanh(text @ w1 + b1) @ w2                       # (N, 1)
    weights = jax.nn.softmax(s, axis=-1)                    # size-1 dim -> all ones
    h_o = jnp.sum(text * weights, axis=0, keepdims=True)    # (1, d_s)
    pre = video @ wc_v + h_o @ wc_t + bc
    return jnp.tanh(pre) @ w3                               # (T, 1)


def init_params(key, text_dim, video_dim, hidden_dim):
    ks = jax.random.split(key, 7)
    scale = 0.1
    w1 = scale * jax.random.normal(ks[0], (text_dim, hidden_dim), jnp.float32)
    b1 = scale * jax.random.normal(ks[1], (1, hidden_dim), jnp.float32)
    w2 = scale * jax.random.normal(ks[2], (hidden_dim, 1), jnp.float32)
    # cross_pipeline Linear-1 has in_features = video_dim + text_dim; the
    # concat order in forward is (video, h_o), so split columns accordingly.
    wc_v = scale * jax.random.normal(ks[3], (video_dim, hidden_dim), jnp.float32)
    wc_t = scale * jax.random.normal(ks[4], (text_dim, hidden_dim), jnp.float32)
    bc = scale * jax.random.normal(ks[5], (1, hidden_dim), jnp.float32)
    w3 = scale * jax.random.normal(ks[6], (hidden_dim, 1), jnp.float32)
    return (w1, b1, w2, wc_v, wc_t, bc, w3)


if __name__ == "__main__":
    # Full f32 matmul precision so the XLA reference matches the in-kernel
    # f32 accumulation tightly.
    jax.config.update("jax_default_matmul_precision", "highest")

    key = jax.random.PRNGKey(0)
    k_text, k_video, k_params, k_video2 = jax.random.split(key, 4)

    # Small shapes consistent with forward: text (N, d_s), video (T, d_v).
    N, T = 8, 16
    text_dim, video_dim, hidden_dim = 32, 32, 32
    text = jax.random.normal(k_text, (N, text_dim), jnp.float32)
    video = jax.random.normal(k_video, (T, video_dim), jnp.float32)
    params = init_params(k_params, text_dim, video_dim, hidden_dim)

    out = jax.block_until_ready(segment_localizer(text, video, params))
    ref = _reference(text, video, params)
    assert out.shape == (T, 1), out.shape
    assert jnp.allclose(out, ref, atol=1e-4, rtol=1e-4), (out, ref)

    # Larger T exercises the tiled (multi-block, row-padded) path.
    T2 = 700
    video2 = jax.random.normal(k_video2, (T2, video_dim), jnp.float32)
    out2 = jax.block_until_ready(segment_localizer(text, video2, params))
    ref2 = _reference(text, video2, params)
    assert out2.shape == (T2, 1), out2.shape
    assert jnp.allclose(out2, ref2, atol=1e-4, rtol=1e-4), (
        float(jnp.max(jnp.abs(out2 - ref2))))

    print("KERNEL_OK")
</pallas_src>

<mosaic_0001>
module attributes {stable_mosaic.version = 11 : i64} {
  func.func @_segment_localizer_kernel(%arg0: i32, %arg1: memref<32x8xf32, #tpu.memory_space<vmem>>, %arg2: memref<16x32xf32, #tpu.memory_space<vmem>>, %arg3: memref<66x32xf32, #tpu.memory_space<vmem>>, %arg4: memref<16x1xf32, #tpu.memory_space<vmem>>) attributes {dimension_semantics = [#tpu.dimension_semantics<parallel>], iteration_bounds = array<i64: 1>, scalar_prefetch = 0 : i64, scratch_operands = 0 : i64, tpu.core_type = #tpu.core_type<tc>, window_params = [{pipeline_mode = #tpu.pipeline_mode<synchronous>, transform_indices = @transform_0, window_bounds = array<i64: 32, 8>}, {transform_indices = @transform_1, window_bounds = array<i64: 16, 32>}, {pipeline_mode = #tpu.pipeline_mode<synchronous>, transform_indices = @transform_2, window_bounds = array<i64: 66, 32>}, {transform_indices = @transform_3, window_bounds = array<i64: 16, 1>}]} {
    %c0 = arith.constant 0 : index
    %c0_0 = arith.constant 0 : index
    %0 = vector.load %arg3[%c0, %c0_0] : memref<66x32xf32, #tpu.memory_space<vmem>>, vector<32x32xf32>
    %c32 = arith.constant 32 : index
    %c0_1 = arith.constant 0 : index
    %1 = vector.load %arg3[%c32, %c0_1] : memref<66x32xf32, #tpu.memory_space<vmem>>, vector<32x32xf32>
    %c64 = arith.constant 64 : index
    %c0_2 = arith.constant 0 : index
    %2 = vector.load %arg3[%c64, %c0_2] : memref<66x32xf32, #tpu.memory_space<vmem>>, vector<1x32xf32>
    %c65 = arith.constant 65 : index
    %c0_3 = arith.constant 0 : index
    %3 = vector.load %arg3[%c65, %c0_3] : memref<66x32xf32, #tpu.memory_space<vmem>>, vector<1x32xf32>
    %c0_4 = arith.constant 0 : index
    %c0_5 = arith.constant 0 : index
    %4 = vector.load %arg1[%c0_4, %c0_5] : memref<32x8xf32, #tpu.memory_space<vmem>>, vector<32x8xf32>
    %cst = arith.constant dense<0.000000e+00> : vector<32xf32>
    %5 = vector.multi_reduction <add>, %4, %cst [1] : vector<32x8xf32> to vector<32xf32>
    %6 = vector.shape_cast %5 : vector<32xf32> to vector<32x1xf32>
    %7 = vector.broadcast %6 : vector<32x1xf32> to vector<32x32xf32>
    %8 = arith.mulf %1, %7 : vector<32x32xf32>
    %cst_6 = arith.constant dense<0.000000e+00> : vector<32xf32>
    %9 = vector.multi_reduction <add>, %8, %cst_6 [0] : vector<32x32xf32> to vector<32xf32>
    %10 = vector.shape_cast %9 : vector<32xf32> to vector<1x32xf32>
    %11 = arith.addf %10, %2 : vector<1x32xf32>
    %c0_7 = arith.constant 0 : index
    %c0_8 = arith.constant 0 : index
    %12 = vector.load %arg2[%c0_7, %c0_8] : memref<16x32xf32, #tpu.memory_space<vmem>>, vector<16x32xf32>
    %cst_9 = arith.constant dense<0.000000e+00> : vector<16x32xf32>
    %13 = tpu.matmul %12, %0, %cst_9 {dimension_numbers = #tpu.dot_dimension_numbers<[1], [0], [0], [1], [0, 0, 1, 1], [], []>, precision = #tpu.contract_precision<fp32>} : vector<16x32xf32>, vector<32x32xf32>, vector<16x32xf32> -> vector<16x32xf32>
    %14 = vector.broadcast %11 : vector<1x32xf32> to vector<16x32xf32>
    %15 = arith.addf %13, %14 : vector<16x32xf32>
    %16 = math.tanh %15 : vector<16x32xf32>
    %17 = vector.broadcast %3 : vector<1x32xf32> to vector<16x32xf32>
    %18 = arith.mulf %16, %17 : vector<16x32xf32>
    %cst_10 = arith.constant dense<0.000000e+00> : vector<16xf32>
    %19 = vector.multi_reduction <add>, %18, %cst_10 [1] : vector<16x32xf32> to vector<16xf32>
    %20 = vector.shape_cast %19 : vector<16xf32> to vector<16x1xf32>
    %c0_11 = arith.constant 0 : index
    %c0_12 = arith.constant 0 : index
    %21 = vector.load %arg4[%c0_11, %c0_12] : memref<16x1xf32, #tpu.memory_space<vmem>>, vector<16x1xf32>
    tpu.vector_store %arg4[%c0_11, %c0_12], %20 {strides = array<i32>} : memref<16x1xf32, #tpu.memory_space<vmem>>, vector<16x1xf32>,
    return
  }
  func.func @transform_0(%arg0: i32) -> (i32, i32) {
    %c0_i32 = arith.constant 0 : i32
    %c0_i32_0 = arith.constant 0 : i32
    %c0_i32_1 = arith.constant 0 : i32
    return %c0_i32, %c0_i32_0 : i32, i32
  }
  func.func @transform_1(%arg0: i32) -> (i32, i32) {
    %c0_i32 = arith.constant 0 : i32
    %c0_i32_0 = arith.constant 0 : i32
    return %arg0, %c0_i32 : i32, i32
  }
  func.func @transform_2(%arg0: i32) -> (i32, i32) {
    %c0_i32 = arith.constant 0 : i32
    %c0_i32_0 = arith.constant 0 : i32
    %c0_i32_1 = arith.constant 0 : i32
    return %c0_i32, %c0_i32_0 : i32, i32
  }
  func.func @transform_3(%arg0: i32) -> (i32, i32) {
    %c0_i32 = arith.constant 0 : i32
    %c0_i32_0 = arith.constant 0 : i32
    return %arg0, %c0_i32 : i32, i32
  }
}

</mosaic_0001>

<llo_original>
// kernel: tpu_custom_call.1
$region0: #{tpu_custom_call.1}
  #allocation0 [shape = 'u32[]', space=smem, size = 0x4, offset = 0x4, fixed_abs, tag = 'smem constant byte address 0x4 - core index']
  #allocation1 [shape = 'u32[144,128]{1,0:T(1,128)}', space=vmem, size = 0x12000, scoped, tag = 'internal scratch']
  %s0 = inlined_call_operand.vmem [shape: f32[32,8], index: 0, kind: input, shape index: {}]
  %s1 = inlined_call_operand.vmem [shape: f32[16,32], index: 1, kind: input, shape index: {}]
  %s2 = inlined_call_operand.vmem [shape: f32[66,32], index: 2, kind: input, shape index: {}]
  %s3 = inlined_call_operand.vmem [shape: f32[16,1], index: 3, kind: output, shape index: {}]
  %s4 = sld [smem:[#allocation0]]
  $region22: #{tpu_custom_call.1} parent=0
    _
  %s6 = ssub.s32 1, %s4
  %s7 = scalar_select 0, %s6, %s4
  // Predicated region
  $region2: #{tpu_custom_call.1} parent=0 // pred_check
    _
  $region3: #{tpu_custom_call.1} parent=0 // pred_check_branch
    %9 = sbr.rel (0) target = $region5
  $region4: #{tpu_custom_call.1} parent=0 // pred_region
    _
  $region5: #{tpu_custom_call.1} parent=0 // pred_fallthru
    _
  // Predicated region
  $region6: #{tpu_custom_call.1} parent=0 // pred_check
    _
  $region7: #{tpu_custom_call.1} parent=0 // pred_check_branch
    %11 = sbr.rel (0) target = $region9
  $region8: #{tpu_custom_call.1} parent=0 // pred_region
    _
  $region9: #{tpu_custom_call.1} parent=0 // pred_fallthru
    _
  // Predicated region
  $region10: #{tpu_custom_call.1} parent=0 // pred_check
    _
  $region11: #{tpu_custom_call.1} parent=0 // pred_check_branch
    %13 = sbr.rel (0) target = $region13
  $region12: #{tpu_custom_call.1} parent=0 // pred_region
    _
  $region13: #{tpu_custom_call.1} parent=0 // pred_fallthru
    _
  %v14 = vld [vmem:[%s2] sm:$0xff]
  %v15 = vld [vmem:[%s2 + $0x8] sm:$0xff]
  %v16 = vld [vmem:[%s2 + $0x10] sm:$0xff]
  %v17 = vld [vmem:[%s2 + $0x18] sm:$0xff]
  %v18 = vld [vmem:[%s2 + $0x20] sm:$0xff]
  %v19 = vld [vmem:[%s2 + $0x28] sm:$0xff]
  %v20 = vld [vmem:[%s2 + $0x30] sm:$0xff]
  %v21 = vld [vmem:[%s2 + $0x38] sm:$0xff]
  %v22 = vld [vmem:[%s2 + $0x40] sm:$0x1]
  %v23 = vld [vmem:[%s2 + $0x41] sm:$0x1]
  %v24 = vld [vmem:[%s0] sm:$0xff]
  %v25 = vld [vmem:[%s0 + $0x8] sm:$0xff]
  %v26 = vld [vmem:[%s0 + $0x10] sm:$0xff]
  %v27 = vld [vmem:[%s0 + $0x18] sm:$0xff]
  %vm28 = vcmask 64512
  %v29 = vsel %vm28, %v24, 0.0
  %30 = vadd.xlane.f32.xlu0 %v29
  %v31 = vpop.xlane.xlu0 %30
  %v32 = vsel %vm28, %v25, 0.0
  %33 = vadd.xlane.f32.xlu0 %v32
  %v34 = vpop.xlane.xlu0 %33
  %v35 = vsel %vm28, %v26, 0.0
  %36 = vadd.xlane.f32.xlu0 %v35
  %v37 = vpop.xlane.xlu0 %36
  %v38 = vsel %vm28, %v27, 0.0
  %39 = vadd.xlane.f32.xlu0 %v38
  %v40 = vpop.xlane.xlu0 %39
  %v41 = vmul.f32 %v18, %v31
  %v42 = vmul.f32 %v19, %v34
  %v43 = vmul.f32 %v20, %v37
  %v44 = vmul.f32 %v21, %v40
  %vm45 = vcmask 261120
  %v46 = vsel %vm45, %v41, 0.0
  %v47 = vsel %vm45, %v42, 0.0
  %v48 = vadd.f32 %v46, %v47
  %v49 = vsel %vm45, %v43, 0.0
  %v50 = vadd.f32 %v48, %v49
  %v51 = vsel %vm45, %v44, 0.0
  %v52 = vadd.f32 %v50, %v51
  %v53 = vrot.slane %v52, 4
  %v54 = vadd.f32 %v52, %v53
  %v55 = vrot.slane %v54, 2
  %v56 = vadd.f32 %v54, %v55
  %v57 = vrot.slane %v56, 1
  %v58 = vadd.f32 %v56, %v57
  %v59 = vadd.f32 %v58, %v22
  %v60 = vld [vmem:[%s1] sm:$0xff]
  %v61 = vld [vmem:[%s1 + $0x8] sm:$0xff]
  %v62 = vlaneseq
  %v63 = vshrl.u32 %v62, 7
  %v64 = vsub.s32 0, %v63
  %v65 = vrot.slane %v59, %v64
  %v67 = vsel %vm45, %v60, 0
  %v70 = vsel %vm45, %v61, 0
  %72 = vmatprep.subr.mxu0 0.0
  %v73 = vand.u32 %v14, 4294901760
  %74 = vmatpush1.msra.mxu0 %v73
  %75 = vmatprep.subr.mxu0 0.0
  %v76 = vand.u32 %v15, 4294901760
  %77 = vmatpush1.msra.mxu0 %v76
  %78 = vmatprep.subr.mxu0 0.0
  %v79 = vand.u32 %v16, 4294901760
  %80 = vmatpush1.msra.mxu0 %v79
  %81 = vmatprep.subr.mxu0 0.0
  %v82 = vand.u32 %v17, 4294901760
  %83 = vmatpush1.msra.mxu0 %v82
  %84 = vmatprep.subr.mxu0 0.0
  %85 = vmatpush1.msra.mxu0 0.0
  %86 = vmatprep.subr.mxu0 0.0
  %87 = vmatpush1.msra.mxu0 0.0
  %88 = vmatprep.subr.mxu0 0.0
  %89 = vmatpush1.msra.mxu0 0.0
  %90 = vmatprep.subr.mxu0 0.0
  %91 = vmatpush1.msra.mxu0 0.0
  %92 = vmatprep.subr.mxu0 0.0
  %93 = vmatpush1.msra.mxu0 0.0
  %94 = vmatprep.subr.mxu0 0.0
  %95 = vmatpush1.msra.mxu0 0.0
  %96 = vmatprep.subr.mxu0 0.0
  %97 = vmatpush1.msra.mxu0 0.0
  %98 = vmatprep.subr.mxu0 0.0
  %99 = vmatpush1.msra.mxu0 0.0
  %100 = vmatprep.subr.mxu0 0.0
  %101 = vmatpush1.msra.mxu0 0.0
  %102 = vmatprep.subr.mxu0 0.0
  %103 = vmatpush1.msra.mxu0 0.0
  %104 = vmatprep.subr.mxu0 0.0
  %105 = vmatpush1.msra.mxu0 0.0
  %106 = vmatprep.subr.mxu0 0.0
  %107 = vmatpush1.msra.mxu0 0.0
  %108 = vmatprep.subr.mxu0 0.0
  %109 = vmatpush1.msra.mxu0 0.0
  %110 = vmatprep.subr.mxu0 0.0
  %111 = vmatpush1.msra.mxu0 0.0
  %112 = vmatprep.subr.mxu0 0.0
  %113 = vmatpush1.msra.mxu0 0.0
  %114 = vmatprep.subr.mxu0 0.0
  %115 = vmatpush1.msra.mxu0 0.0
  %116 = vmatprep.subr.mxu0 0.0
  %117 = vmatpush1.msra.mxu0 0.0
  %118 = vmatprep.subr.mxu0 0.0
  %119 = vmatpush1.msra.mxu0 0.0
  %120 = vmatprep.subr.mxu0 0.0
  %121 = vmatpush1.msra.mxu0 0.0
  %122 = vmatprep.subr.mxu0 0.0
  %123 = vmatpush1.msra.mxu0 0.0
  %124 = vmatprep.subr.mxu0 0.0
  %125 = vmatpush1.msra.mxu0 0.0
  %126 = vmatprep.subr.mxu0 0.0
  %127 = vmatpush1.msra.mxu0 0.0
  %128 = vmatprep.subr.mxu0 0.0
  %129 = vmatpush1.msra.mxu0 0.0
  %130 = vmatprep.subr.mxu0 0.0
  %131 = vmatpush1.msra.mxu0 0.0
  %132 = vmatprep.subr.mxu0 0.0
  %133 = vmatpush1.msra.mxu0 0.0
  %134 = vmatprep.subr.mxu0 0.0
  %135 = vmatpush1.msra.mxu0 0.0
  %136 = vmatprep.subr.mxu0 0.0
  %137 = vmatpush1.msra.mxu0 0.0
  %138 = vmatprep.subr.mxu0 0.0
  %139 = vmatpush1.msra.mxu0 0.0
  %140 = vmatprep.mubr.f32.mxu0 0.0
  %v141 = vand.u32 %v67, 4294901760
  %v142 = vsub.f32 %v67, %v141
  %v143 = vand.u32 %v142, 4294901760
  %v144 = vsub.f32 %v142, %v143
  %v145 = vand.u32 %v144, 4294901760
  %146 = vmatmul.mubr.f32.gmra.mrb[0].mxu0 %v145
  %v147 = vpop.f32.mrb[0].mxu0
  %v148 = vadd.f32 %v65, %v147
  %v149 = vpop.f32.mrb[0].mxu0
  %150 = vmatprep.mubr.f32.mxu0 0.0
  %v151 = vand.u32 %v70, 4294901760
  %v152 = vsub.f32 %v70, %v151
  %v153 = vand.u32 %v152, 4294901760
  %v154 = vsub.f32 %v152, %v153
  %v155 = vand.u32 %v154, 4294901760
  %156 = vmatmul.mubr.f32.gmra.mrb[0].mxu0 %v155
  %v157 = vpop.f32.mrb[0].mxu0
  %v158 = vadd.f32 %v65, %v157
  %v159 = vpop.f32.mrb[0].mxu0
  %160 = vdwg.mxu0
  %161 = vmatprep.subr.mxu0 0.0
  %v162 = vand.u32 %v14, 4294901760
  %v163 = vsub.f32 %v14, %v162
  %v164 = vand.u32 %v163, 4294901760
  %v165 = vsub.f32 %v163, %v164
  %v166 = vand.u32 %v165, 4294901760
  %167 = vmatpush1.msra.mxu0 %v166
  %168 = vmatprep.subr.mxu0 0.0
  %v169 = vand.u32 %v15, 4294901760
  %v170 = vsub.f32 %v15, %v169
  %v171 = vand.u32 %v170, 4294901760
  %v172 = vsub.f32 %v170, %v171
  %v173 = vand.u32 %v172, 4294901760
  %174 = vmatpush1.msra.mxu0 %v173
  %175 = vmatprep.subr.mxu0 0.0
  %v176 = vand.u32 %v16, 4294901760
  %v177 = vsub.f32 %v16, %v176
  %v178 = vand.u32 %v177, 4294901760
  %v179 = vsub.f32 %v177, %v178
  %v180 = vand.u32 %v179, 4294901760
  %181 = vmatpush1.msra.mxu0 %v180
  %182 = vmatprep.subr.mxu0 0.0
  %v183 = vand.u32 %v17, 4294901760
  %v184 = vsub.f32 %v17, %v183
  %v185 = vand.u32 %v184, 4294901760
  %v186 = vsub.f32 %v184, %v185
  %v187 = vand.u32 %v186, 4294901760
  %188 = vmatpush1.msra.mxu0 %v187
  %189 = vmatprep.subr.mxu0 0.0
  %190 = vmatpush1.msra.mxu0 0.0
  %191 = vmatprep.subr.mxu0 0.0
  %192 = vmatpush1.msra.mxu0 0.0
  %193 = vmatprep.subr.mxu0 0.0
  %194 = vmatpush1.msra.mxu0 0.0
  %195 = vmatprep.subr.mxu0 0.0
  %196 = vmatpush1.msra.mxu0 0.0
  %197 = vmatprep.subr.mxu0 0.0
  %198 = vmatpush1.msra.mxu0 0.0
  %199 = vmatprep.subr.mxu0 0.0
  %200 = vmatpush1.msra.mxu0 0.0
  %201 = vmatprep.subr.mxu0 0.0
  %202 = vmatpush1.msra.mxu0 0.0
  %203 = vmatprep.subr.mxu0 0.0
  %204 = vmatpush1.msra.mxu0 0.0
  %205 = vmatprep.subr.mxu0 0.0
  %206 = vmatpush1.msra.mxu0 0.0
  %207 = vmatprep.subr.mxu0 0.0
  %208 = vmatpush1.msra.mxu0 0.0
  %209 = vmatprep.subr.mxu0 0.0
  %210 = vmatpush1.msra.mxu0 0.0
  %211 = vmatprep.subr.mxu0 0.0
  %212 = vmatpush1.msra.mxu0 0.0
  %213 = vmatprep.subr.mxu0 0.0
  %214 = vmatpush1.msra.mxu0 0.0
  %215 = vmatprep.subr.mxu0 0.0
  %216 = vmatpush1.msra.mxu0 0.0
  %217 = vmatprep.subr.mxu0 0.0
  %218 = vmatpush1.msra.mxu0 0.0
  %219 = vmatprep.subr.mxu0 0.0
  %220 = vmatpush1.msra.mxu0 0.0
  %221 = vmatprep.subr.mxu0 0.0
  %222 = vmatpush1.msra.mxu0 0.0
  %223 = vmatprep.subr.mxu0 0.0
  %224 = vmatpush1.msra.mxu0 0.0
  %225 = vmatprep.subr.mxu0 0.0
  %226 = vmatpush1.msra.mxu0 0.0
  %227 = vmatprep.subr.mxu0 0.0
  %228 = vmatpush1.msra.mxu0 0.0
  %229 = vmatprep.subr.mxu0 0.0
  %230 = vmatpush1.msra.mxu0 0.0
  %231 = vmatprep.subr.mxu0 0.0
  %232 = vmatpush1.msra.mxu0 0.0
  %233 = vmatprep.subr.mxu0 0.0
  %234 = vmatpush1.msra.mxu0 0.0
  %235 = vmatprep.subr.mxu0 0.0
  %236 = vmatpush1.msra.mxu0 0.0
  %237 = vmatprep.subr.mxu0 0.0
  %238 = vmatpush1.msra.mxu0 0.0
  %239 = vmatprep.subr.mxu0 0.0
  %240 = vmatpush1.msra.mxu0 0.0
  %241 = vmatprep.subr.mxu0 0.0
  %242 = vmatpush1.msra.mxu0 0.0
  %243 = vmatprep.subr.mxu0 0.0
  %244 = vmatpush1.msra.mxu0 0.0
  %245 = vmatprep.mubr.f32.mxu0 0.0
  %v246 = vand.u32 %v67, 4294901760
  %247 = vmatmul.mubr.f32.gmra.mrb[0].mxu0 %v246
  %v248 = vpop.f32.mrb[0].mxu0
  %v249 = vadd.f32 %v148, %v248
  %v250 = vpop.f32.mrb[0].mxu0
  %251 = vmatprep.mubr.f32.mxu0 0.0
  %v252 = vand.u32 %v70, 4294901760
  %253 = vmatmul.mubr.f32.gmra.mrb[0].mxu0 %v252
  %v254 = vpop.f32.mrb[0].mxu0
  %v255 = vadd.f32 %v158, %v254
  %v256 = vpop.f32.mrb[0].mxu0
  %257 = vdwg.mxu0
  %258 = vmatprep.subr.mxu0 0.0
  %v259 = vand.u32 %v14, 4294901760
  %v260 = vsub.f32 %v14, %v259
  %261 = vmatpush1.msra.mxu0 %v260
  %262 = vmatprep.subr.mxu0 0.0
  %v263 = vand.u32 %v15, 4294901760
  %v264 = vsub.f32 %v15, %v263
  %265 = vmatpush1.msra.mxu0 %v264
  %266 = vmatprep.subr.mxu0 0.0
  %v267 = vand.u32 %v16, 4294901760
  %v268 = vsub.f32 %v16, %v267
  %269 = vmatpush1.msra.mxu0 %v268
  %270 = vmatprep.subr.mxu0 0.0
  %v271 = vand.u32 %v17, 4294901760
  %v272 = vsub.f32 %v17, %v271
  %273 = vmatpush1.msra.mxu0 %v272
  %274 = vmatprep.subr.mxu0 0.0
  %275 = vmatpush1.msra.mxu0 0.0
  %276 = vmatprep.subr.mxu0 0.0
  %277 = vmatpush1.msra.mxu0 0.0
  %278 = vmatprep.subr.mxu0 0.0
  %279 = vmatpush1.msra.mxu0 0.0
  %280 = vmatprep.subr.mxu0 0.0
  %281 = vmatpush1.msra.mxu0 0.0
  %282 = vmatprep.subr.mxu0 0.0
  %283 = vmatpush1.msra.mxu0 0.0
  %284 = vmatprep.subr.mxu0 0.0
  %285 = vmatpush1.msra.mxu0 0.0
  %286 = vmatprep.subr.mxu0 0.0
  %287 = vmatpush1.msra.mxu0 0.0
  %288 = vmatprep.subr.mxu0 0.0
  %289 = vmatpush1.msra.mxu0 0.0
  %290 = vmatprep.subr.mxu0 0.0
  %291 = vmatpush1.msra.mxu0 0.0
  %292 = vmatprep.subr.mxu0 0.0
  %293 = vmatpush1.msra.mxu0 0.0
  %294 = vmatprep.subr.mxu0 0.0
  %295 = vmatpush1.msra.mxu0 0.0
  %296 = vmatprep.subr.mxu0 0.0
  %297 = vmatpush1.msra.mxu0 0.0
  %298 = vmatprep.subr.mxu0 0.0
  %299 = vmatpush1.msra.mxu0 0.0
  %300 = vmatprep.subr.mxu0 0.0
  %301 = vmatpush1.msra.mxu0 0.0
  %302 = vmatprep.subr.mxu0 0.0
  %303 = vmatpush1.msra.mxu0 0.0
  %304 = vmatprep.subr.mxu0 0.0
  %305 = vmatpush1.msra.mxu0 0.0
  %306 = vmatprep.subr.mxu0 0.0
  %307 = vmatpush1.msra.mxu0 0.0
  %308 = vmatprep.subr.mxu0 0.0
  %309 = vmatpush1.msra.mxu0 0.0
  %310 = vmatprep.subr.mxu0 0.0
  %311 = vmatpush1.msra.mxu0 0.0
  %312 = vmatprep.subr.mxu0 0.0
  %313 = vmatpush1.msra.mxu0 0.0
  %314 = vmatprep.subr.mxu0 0.0
  %315 = vmatpush1.msra.mxu0 0.0
  %316 = vmatprep.subr.mxu0 0.0
  %317 = vmatpush1.msra.mxu0 0.0
  %318 = vmatprep.subr.mxu0 0.0
  %319 = vmatpush1.msra.mxu0 0.0
  %320 = vmatprep.subr.mxu0 0.0
  %321 = vmatpush1.msra.mxu0 0.0
  %322 = vmatprep.subr.mxu0 0.0
  %323 = vmatpush1.msra.mxu0 0.0
  %324 = vmatprep.subr.mxu0 0.0
  %325 = vmatpush1.msra.mxu0 0.0
  %326 = vmatprep.subr.mxu0 0.0
  %327 = vmatpush1.msra.mxu0 0.0
  %328 = vmatprep.subr.mxu0 0.0
  %329 = vmatpush1.msra.mxu0 0.0
  %330 = vmatprep.mubr.f32.mxu0 0.0
  %v331 = vand.u32 %v67, 4294901760
  %v332 = vsub.f32 %v67, %v331
  %333 = vmatmul.mubr.f32.gmra.mrb[0].mxu0 %v332
  %v334 = vpop.f32.mrb[0].mxu0
  %v335 = vadd.f32 %v249, %v334
  %v336 = vpop.f32.mrb[0].mxu0
  %337 = vmatprep.mubr.f32.mxu0 0.0
  %v338 = vand.u32 %v70, 4294901760
  %v339 = vsub.f32 %v70, %v338
  %340 = vmatmul.mubr.f32.gmra.mrb[0].mxu0 %v339
  %v341 = vpop.f32.mrb[0].mxu0
  %v342 = vadd.f32 %v255, %v341
  %v343 = vpop.f32.mrb[0].mxu0
  %344 = vdwg.mxu0
  %345 = vmatprep.subr.mxu0 0.0
  %v346 = vand.u32 %v14, 4294901760
  %347 = vmatpush1.msra.mxu0 %v346
  %348 = vmatprep.subr.mxu0 0.0
  %v349 = vand.u32 %v15, 4294901760
  %350 = vmatpush1.msra.mxu0 %v349
  %351 = vmatprep.subr.mxu0 0.0
  %v352 = vand.u32 %v16, 4294901760
  %353 = vmatpush1.msra.mxu0 %v352
  %354 = vmatprep.subr.mxu0 0.0
  %v355 = vand.u32 %v17, 4294901760
  %356 = vmatpush1.msra.mxu0 %v355
  %357 = vmatprep.subr.mxu0 0.0
  %358 = vmatpush1.msra.mxu0 0.0
  %359 = vmatprep.subr.mxu0 0.0
  %360 = vmatpush1.msra.mxu0 0.0
  %361 = vmatprep.subr.mxu0 0.0
  %362 = vmatpush1.msra.mxu0 0.0
  %363 = vmatprep.subr.mxu0 0.0
  %364 = vmatpush1.msra.mxu0 0.0
  %365 = vmatprep.subr.mxu0 0.0
  %366 = vmatpush1.msra.mxu0 0.0
  %367 = vmatprep.subr.mxu0 0.0
  %368 = vmatpush1.msra.mxu0 0.0
  %369 = vmatprep.subr.mxu0 0.0
  %370 = vmatpush1.msra.mxu0 0.0
  %371 = vmatprep.subr.mxu0 0.0
  %372 = vmatpush1.msra.mxu0 0.0
  %373 = vmatprep.subr.mxu0 0.0
  %374 = vmatpush1.msra.mxu0 0.0
  %375 = vmatprep.subr.mxu0 0.0
  %376 = vmatpush1.msra.mxu0 0.0
  %377 = vmatprep.subr.mxu0 0.0
  %378 = vmatpush1.msra.mxu0 0.0
  %379 = vmatprep.subr.mxu0 0.0
  %380 = vmatpush1.msra.mxu0 0.0
  %381 = vmatprep.subr.mxu0 0.0
  %382 = vmatpush1.msra.mxu0 0.0
  %383 = vmatprep.subr.mxu0 0.0
  %384 = vmatpush1.msra.mxu0 0.0
  %385 = vmatprep.subr.mxu0 0.0
  %386 = vmatpush1.msra.mxu0 0.0
  %387 = vmatprep.subr.mxu0 0.0
  %388 = vmatpush1.msra.mxu0 0.0
  %389 = vmatprep.subr.mxu0 0.0
  %390 = vmatpush1.msra.mxu0 0.0
  %391 = vmatprep.subr.mxu0 0.0
  %392 = vmatpush1.msra.mxu0 0.0
  %393 = vmatprep.subr.mxu0 0.0
  %394 = vmatpush1.msra.mxu0 0.0
  %395 = vmatprep.subr.mxu0 0.0
  %396 = vmatpush1.msra.mxu0 0.0
  %397 = vmatprep.subr.mxu0 0.0
  %398 = vmatpush1.msra.mxu0 0.0
  %399 = vmatprep.subr.mxu0 0.0
  %400 = vmatpush1.msra.mxu0 0.0
  %401 = vmatprep.subr.mxu0 0.0
  %402 = vmatpush1.msra.mxu0 0.0
  %403 = vmatprep.subr.mxu0 0.0
  %404 = vmatpush1.msra.mxu0 0.0
  %405 = vmatprep.subr.mxu0 0.0
  %406 = vmatpush1.msra.mxu0 0.0
  %407 = vmatprep.subr.mxu0 0.0
  %408 = vmatpush1.msra.mxu0 0.0
  %409 = vmatprep.subr.mxu0 0.0
  %410 = vmatpush1.msra.mxu0 0.0
  %411 = vmatprep.subr.mxu0 0.0
  %412 = vmatpush1.msra.mxu0 0.0
  %413 = vmatprep.mubr.f32.mxu0 0.0
  %v414 = vand.u32 %v67, 4294901760
  %v415 = vsub.f32 %v67, %v414
  %v416 = vand.u32 %v415, 4294901760
  %417 = vmatmul.mubr.f32.gmra.mrb[0].mxu0 %v416
  %v418 = vpop.f32.mrb[0].mxu0
  %v419 = vadd.f32 %v335, %v418
  %v420 = vpop.f32.mrb[0].mxu0
  %421 = vmatprep.mubr.f32.mxu0 0.0
  %v422 = vand.u32 %v70, 4294901760
  %v423 = vsub.f32 %v70, %v422
  %v424 = vand.u32 %v423, 4294901760
  %425 = vmatmul.mubr.f32.gmra.mrb[0].mxu0 %v424
  %v426 = vpop.f32.mrb[0].mxu0
  %v427 = vadd.f32 %v342, %v426
  %v428 = vpop.f32.mrb[0].mxu0
  %429 = vdwg.mxu0
  %430 = vmatprep.subr.mxu0 0.0
  %v431 = vand.u32 %v14, 4294901760
  %v432 = vsub.f32 %v14, %v431
  %v433 = vand.u32 %v432, 4294901760
  %434 = vmatpush1.msra.mxu0 %v433
  %435 = vmatprep.subr.mxu0 0.0
  %v436 = vand.u32 %v15, 4294901760
  %v437 = vsub.f32 %v15, %v436
  %v438 = vand.u32 %v437, 4294901760
  %439 = vmatpush1.msra.mxu0 %v438
  %440 = vmatprep.subr.mxu0 0.0
  %v441 = vand.u32 %v16, 4294901760
  %v442 = vsub.f32 %v16, %v441
  %v443 = vand.u32 %v442, 4294901760
  %444 = vmatpush1.msra.mxu0 %v443
  %445 = vmatprep.subr.mxu0 0.0
  %v446 = vand.u32 %v17, 4294901760
  %v447 = vsub.f32 %v17, %v446
  %v448 = vand.u32 %v447, 4294901760
  %449 = vmatpush1.msra.mxu0 %v448
  %450 = vmatprep.subr.mxu0 0.0
  %451 = vmatpush1.msra.mxu0 0.0
  %452 = vmatprep.subr.mxu0 0.0
  %453 = vmatpush1.msra.mxu0 0.0
  %454 = vmatprep.subr.mxu0 0.0
  %455 = vmatpush1.msra.mxu0 0.0
  %456 = vmatprep.subr.mxu0 0.0
  %457 = vmatpush1.msra.mxu0 0.0
  %458 = vmatprep.subr.mxu0 0.0
  %459 = vmatpush1.msra.mxu0 0.0
  %460 = vmatprep.subr.mxu0 0.0
  %461 = vmatpush1.msra.mxu0 0.0
  %462 = vmatprep.subr.mxu0 0.0
  %463 = vmatpush1.msra.mxu0 0.0
  %464 = vmatprep.subr.mxu0 0.0
  %465 = vmatpush1.msra.mxu0 0.0
  %466 = vmatprep.subr.mxu0 0.0
  %467 = vmatpush1.msra.mxu0 0.0
  %468 = vmatprep.subr.mxu0 0.0
  %469 = vmatpush1.msra.mxu0 0.0
  %470 = vmatprep.subr.mxu0 0.0
  %471 = vmatpush1.msra.mxu0 0.0
  %472 = vmatprep.subr.mxu0 0.0
  %473 = vmatpush1.msra.mxu0 0.0
  %474 = vmatprep.subr.mxu0 0.0
  %475 = vmatpush1.msra.mxu0 0.0
  %476 = vmatprep.subr.mxu0 0.0
  %477 = vmatpush1.msra.mxu0 0.0
  %478 = vmatprep.subr.mxu0 0.0
  %479 = vmatpush1.msra.mxu0 0.0
  %480 = vmatprep.subr.mxu0 0.0
  %481 = vmatpush1.msra.mxu0 0.0
  %482 = vmatprep.subr.mxu0 0.0
  %483 = vmatpush1.msra.mxu0 0.0
  %484 = vmatprep.subr.mxu0 0.0
  %485 = vmatpush1.msra.mxu0 0.0
  %486 = vmatprep.subr.mxu0 0.0
  %487 = vmatpush1.msra.mxu0 0.0
  %488 = vmatprep.subr.mxu0 0.0
  %489 = vmatpush1.msra.mxu0 0.0
  %490 = vmatprep.subr.mxu0 0.0
  %491 = vmatpush1.msra.mxu0 0.0
  %492 = vmatprep.subr.mxu0 0.0
  %493 = vmatpush1.msra.mxu0 0.0
  %494 = vmatprep.subr.mxu0 0.0
  %495 = vmatpush1.msra.mxu0 0.0
  %496 = vmatprep.subr.mxu0 0.0
  %497 = vmatpush1.msra.mxu0 0.0
  %498 = vmatprep.subr.mxu0 0.0
  %499 = vmatpush1.msra.mxu0 0.0
  %500 = vmatprep.subr.mxu0 0.0
  %501 = vmatpush1.msra.mxu0 0.0
  %502 = vmatprep.subr.mxu0 0.0
  %503 = vmatpush1.msra.mxu0 0.0
  %504 = vmatprep.subr.mxu0 0.0
  %505 = vmatpush1.msra.mxu0 0.0
  %506 = vmatprep.mubr.f32.mxu0 0.0
  %v507 = vand.u32 %v67, 4294901760
  %508 = vmatmul.mubr.f32.gmra.mrb[0].mxu0 %v507
  %v509 = vpop.f32.mrb[0].mxu0
  %v510 = vadd.f32 %v419, %v509
  %v511 = vpop.f32.mrb[0].mxu0
  %512 = vmatprep.mubr.f32.mxu0 0.0
  %v513 = vand.u32 %v70, 4294901760
  %514 = vmatmul.mubr.f32.gmra.mrb[0].mxu0 %v513
  %v515 = vpop.f32.mrb[0].mxu0
  %v516 = vadd.f32 %v427, %v515
  %v517 = vpop.f32.mrb[0].mxu0
  %518 = vdwg.mxu0
  %519 = vmatprep.subr.mxu0 0.0
  %v520 = vand.u32 %v14, 4294901760
  %521 = vmatpush1.msra.mxu0 %v520
  %522 = vmatprep.subr.mxu0 0.0
  %v523 = vand.u32 %v15, 4294901760
  %524 = vmatpush1.msra.mxu0 %v523
  %525 = vmatprep.subr.mxu0 0.0
  %v526 = vand.u32 %v16, 4294901760
  %527 = vmatpush1.msra.mxu0 %v526
  %528 = vmatprep.subr.mxu0 0.0
  %v529 = vand.u32 %v17, 4294901760
  %530 = vmatpush1.msra.mxu0 %v529
  %531 = vmatprep.subr.mxu0 0.0
  %532 = vmatpush1.msra.mxu0 0.0
  %533 = vmatprep.subr.mxu0 0.0
  %534 = vmatpush1.msra.mxu0 0.0
  %535 = vmatprep.subr.mxu0 0.0
  %536 = vmatpush1.msra.mxu0 0.0
  %537 = vmatprep.subr.mxu0 0.0
  %538 = vmatpush1.msra.mxu0 0.0
  %539 = vmatprep.subr.mxu0 0.0
  %540 = vmatpush1.msra.mxu0 0.0
  %541 = vmatprep.subr.mxu0 0.0
  %542 = vmatpush1.msra.mxu0 0.0
  %543 = vmatprep.subr.mxu0 0.0
  %544 = vmatpush1.msra.mxu0 0.0
  %545 = vmatprep.subr.mxu0 0.0
  %546 = vmatpush1.msra.mxu0 0.0
  %547 = vmatprep.subr.mxu0 0.0
  %548 = vmatpush1.msra.mxu0 0.0
  %549 = vmatprep.subr.mxu0 0.0
  %550 = vmatpush1.msra.mxu0 0.0
  %551 = vmatprep.subr.mxu0 0.0
  %552 = vmatpush1.msra.mxu0 0.0
  %553 = vmatprep.subr.mxu0 0.0
  %554 = vmatpush1.msra.mxu0 0.0
  %555 = vmatprep.subr.mxu0 0.0
  %556 = vmatpush1.msra.mxu0 0.0
  %557 = vmatprep.subr.mxu0 0.0
  %558 = vmatpush1.msra.mxu0 0.0
  %559 = vmatprep.subr.mxu0 0.0
  %560 = vmatpush1.msra.mxu0 0.0
  %561 = vmatprep.subr.mxu0 0.0
  %562 = vmatpush1.msra.mxu0 0.0
  %563 = vmatprep.subr.mxu0 0.0
  %564 = vmatpush1.msra.mxu0 0.0
  %565 = vmatprep.subr.mxu0 0.0
  %566 = vmatpush1.msra.mxu0 0.0
  %567 = vmatprep.subr.mxu0 0.0
  %568 = vmatpush1.msra.mxu0 0.0
  %569 = vmatprep.subr.mxu0 0.0
  %570 = vmatpush1.msra.mxu0 0.0
  %571 = vmatprep.subr.mxu0 0.0
  %572 = vmatpush1.msra.mxu0 0.0
  %573 = vmatprep.subr.mxu0 0.0
  %574 = vmatpush1.msra.mxu0 0.0
  %575 = vmatprep.subr.mxu0 0.0
  %576 = vmatpush1.msra.mxu0 0.0
  %577 = vmatprep.subr.mxu0 0.0
  %578 = vmatpush1.msra.mxu0 0.0
  %579 = vmatprep.subr.mxu0 0.0
  %580 = vmatpush1.msra.mxu0 0.0
  %581 = vmatprep.subr.mxu0 0.0
  %582 = vmatpush1.msra.mxu0 0.0
  %583 = vmatprep.subr.mxu0 0.0
  %584 = vmatpush1.msra.mxu0 0.0
  %585 = vmatprep.subr.mxu0 0.0
  %586 = vmatpush1.msra.mxu0 0.0
  %587 = vmatprep.mubr.f32.mxu0 0.0
  %v588 = vand.u32 %v67, 4294901760
  %589 = vmatmul.mubr.f32.gmra.mrb[0].mxu0 %v588
  %v590 = vpop.f32.mrb[0].mxu0
  %v591 = vadd.f32 %v510, %v590
  %v592 = vpop.f32.mrb[0].mxu0
  %593 = vmatprep.mubr.f32.mxu0 0.0
  %v594 = vand.u32 %v70, 4294901760
  %595 = vmatmul.mubr.f32.gmra.mrb[0].mxu0 %v594
  %v596 = vpop.f32.mrb[0].mxu0
  %v597 = vadd.f32 %v516, %v596
  %v598 = vpop.f32.mrb[0].mxu0
  %599 = vdwg.mxu0
  %v600 = vtanh.pop %v591
  %v601 = vtanh.pop %v597
  %v602 = vlaneseq
  %v603 = vshrl.u32 %v602, 7
  %v604 = vsub.s32 0, %v603
  %v605 = vrot.slane %v23, %v604
  %v606 = vmul.f32 %v600, %v605
  %v607 = vmul.f32 %v601, %v605
  %v608 = vsel %vm45, %v606, 0.0
  %609 = vadd.xlane.f32.xlu0 %v608
  %v610 = vpop.xlane.xlu0 %609
  %v611 = vsel %vm45, %v607, 0.0
  %612 = vadd.xlane.f32.xlu0 %v611
  %v613 = vpop.xlane.xlu0 %612
  %vm614 = vcmask 7168
  %615 = vst.msk [vmem:[%s3] sm:$0xff] %vm614, %v610
  %616 = vst.msk [vmem:[%s3 + $0x8] sm:$0xff] %vm614, %v613
  // Predicated region
  $region14: #{tpu_custom_call.1} parent=0 // pred_check
    _
  $region15: #{tpu_custom_call.1} parent=0 // pred_check_branch
    %618 = sbr.rel (0) target = $region17
  $region16: #{tpu_custom_call.1} parent=0 // pred_region
    _
  $region17: #{tpu_custom_call.1} parent=0 // pred_fallthru
    _
  // Predicated region
  $region18: #{tpu_custom_call.1} parent=0 // pred_check
    _
  $region19: #{tpu_custom_call.1} parent=0 // pred_check_branch
    %620 = sbr.rel (0) target = $region21
  $region20: #{tpu_custom_call.1} parent=0 // pred_region
    _
  $region21: #{tpu_custom_call.1} parent=0 // pred_fallthru
    _

</llo_original>
